<compile_context>
chip_gen: v7x
topology: tpu7x:2x2x1
jax: 0.10.0
libtpu: 0.0.40
codegen_flags: <defaults>
</compile_context>

<pallas_src>
import jax
import jax.numpy as jnp
from jax.experimental import pallas as pl
from jax.experimental.pallas import tpu as pltpu

LANE = 128
SUBLANE = 8


def _round_up(n, m):
    return ((n + m - 1) // m) * m


def _bf16_vpu_available():
    """bf16 VPU/EUP epilogue only on v6e and newer (v5e has no bf16 VALU/EUP)."""
    try:
        kind = jax.devices()[0].device_kind.lower()
    except Exception:
        return False
    return not any(tag in kind for tag in ("v2", "v3", "v4", "v5"))


def actor_net_kernel(x_ref,
                     w1_ref, b1_ref,
                     w2_ref, b2_ref,
                     w3_ref, b3_ref,
                     w4_ref, b4_ref,
                     o_ref):
    """Fused MLP: 3x (MXU dot + bias + ReLU) then MXU dot + bias + tanh.

    MXU inputs are bf16 with f32 accumulation. The elementwise epilogue runs
    in the bias dtype: f32 on v5e, bf16 (packed VPU) on v6e/v7x.
    """
    def hidden(h_acc, b_ref):
        h = h_acc.astype(b_ref.dtype) + b_ref[...]
        return jnp.maximum(h, 0).astype(jnp.bfloat16)

    # Layer 1: Linear(128-padded state_dim -> 256) + ReLU
    h = jnp.dot(x_ref[...], w1_ref[...], preferred_element_type=jnp.float32)
    h = hidden(h, b1_ref)
    # Layer 2: Linear(256 -> 512) + ReLU
    h = jnp.dot(h, w2_ref[...], preferred_element_type=jnp.float32)
    h = hidden(h, b2_ref)
    # Layer 3: Linear(512 -> 256) + ReLU
    h = jnp.dot(h, w3_ref[...], preferred_element_type=jnp.float32)
    h = hidden(h, b3_ref)
    # Layer 4: Linear(256 -> 128 [action_dim zero-padded]) + Tanh
    h = jnp.dot(h, w4_ref[...], preferred_element_type=jnp.float32)
    o_ref[...] = jnp.tanh(h.astype(b4_ref.dtype) + b4_ref[...]).astype(o_ref.dtype)


def init_actor_params(key, state_dim=8, action_dim=2, hidden_dim=(256, 512, 256)):
    """nn.Linear-style U(-1/sqrt(fan_in), 1/sqrt(fan_in)) init.

    Weights are stored as [in, out] (transposed vs. PyTorch) so the kernel
    computes x @ W. Biases are [1, out]. All float32 (master copy).
    """
    dims = [state_dim, hidden_dim[0], hidden_dim[1], hidden_dim[2], action_dim]
    params = []
    for i in range(4):
        fan_in, fan_out = dims[i], dims[i + 1]
        key, kw, kb = jax.random.split(key, 3)
        bound = 1.0 / jnp.sqrt(jnp.float32(fan_in))
        w = jax.random.uniform(kw, (fan_in, fan_out), jnp.float32, -bound, bound)
        b = jax.random.uniform(kb, (1, fan_out), jnp.float32, -bound, bound)
        params.extend([w, b])
    return tuple(params)


def prepare_params(params, *, bias_dtype=jnp.float32):
    """Cast weights to bf16 (MXU-native); pad layer-1 K and layer-4 N to 128.

    `bias_dtype` selects the epilogue precision: f32 on v5e, bf16 on v6e/v7x.
    """
    w1, b1, w2, b2, w3, b3, w4, b4 = params
    # Pad layer-1 contraction dim (state_dim) up to a lane-dense multiple of 128.
    k_in = _round_up(w1.shape[0], LANE)
    w1p = jnp.pad(w1, ((0, k_in - w1.shape[0]), (0, 0)))
    # Pad layer-4 output dim (action_dim) to 128 lanes for unmasked stores.
    n_out = _round_up(w4.shape[-1], LANE)
    w4p = jnp.pad(w4, ((0, 0), (0, n_out - w4.shape[-1])))
    b4p = jnp.pad(b4, ((0, 0), (0, n_out - b4.shape[-1])))
    return (w1p.astype(jnp.bfloat16), b1.astype(bias_dtype),
            w2.astype(jnp.bfloat16), b2.astype(bias_dtype),
            w3.astype(jnp.bfloat16), b3.astype(bias_dtype),
            w4p.astype(jnp.bfloat16), b4p.astype(bias_dtype))


def actor_net_forward(x, prepared_params, action_dim, *, block_batch=1024):
    """x: [B, state_dim] float32; prepared_params: output of prepare_params."""
    B, state_dim = x.shape
    w1, b1, w2, b2, w3, b3, w4, b4 = prepared_params
    k_in = w1.shape[0]      # 128-padded contraction dim
    n_out = w4.shape[1]     # 128-padded output dim

    # Batch tile: up to block_batch rows (amortize grid-step overhead), but
    # clamped so the grid has >= 2 tiles when the batch allows it — v7x
    # shards the "parallel" batch axis across its 2 TensorCores. Sublane
    # aligned; cap at 1024 keeps f32 intermediates inside v5e's default
    # scoped VMEM without extra flags.
    tb = min(block_batch, max(SUBLANE, _round_up(pl.cdiv(B, 2), SUBLANE)))
    b_pad = _round_up(B, tb)
    grid = (b_pad // tb,)

    # Lane-dense, sublane-aligned bf16 input tile.
    x = x.astype(jnp.bfloat16)
    if b_pad != B or k_in != state_dim:
        x = jnp.pad(x, ((0, b_pad - B), (0, k_in - state_dim)))

    def const_spec(shape):
        # Constant index_map -> block never changes -> weight stays VMEM-resident.
        return pl.BlockSpec(shape, lambda i: (0, 0))

    in_specs = [
        pl.BlockSpec((tb, k_in), lambda i: (i, 0)),   # x: streamed per batch tile
        const_spec(w1.shape), const_spec(b1.shape),
        const_spec(w2.shape), const_spec(b2.shape),
        const_spec(w3.shape), const_spec(b3.shape),
        const_spec(w4.shape), const_spec(b4.shape),
    ]
    out_specs = pl.BlockSpec((tb, n_out), lambda i: (i, 0))

    h0, h1, h2 = w1.shape[1], w2.shape[1], w3.shape[1]
    flops = 2 * b_pad * (k_in * h0 + h0 * h1 + h1 * h2 + h2 * n_out)
    weight_bytes = sum(int(p.size) * p.dtype.itemsize for p in prepared_params)
    bytes_accessed = int(weight_bytes + b_pad * k_in * 2 + b_pad * n_out * 2)
    cost = pl.CostEstimate(flops=int(flops),
                           transcendentals=int(b_pad * n_out),
                           bytes_accessed=bytes_accessed)

    out = pl.pallas_call(
        actor_net_kernel,
        out_shape=jax.ShapeDtypeStruct((b_pad, n_out), jnp.bfloat16),
        grid=grid,
        in_specs=in_specs,
        out_specs=out_specs,
        compiler_params=pltpu.CompilerParams(
            dimension_semantics=("parallel",)),
        cost_estimate=cost,
    )(x, w1, b1, w2, b2, w3, b3, w4, b4)

    # bf16 storage halves the dominant HBM writeback; upcast for callers
    # expecting f32 (precision ~3 significant digits on tanh outputs).
    return out[:B, :action_dim].astype(jnp.float32)


def reference_forward(x, params):
    """Pure-JAX f32 reference (matches the PyTorch module)."""
    w1, b1, w2, b2, w3, b3, w4, b4 = params
    h = jnp.maximum(x @ w1 + b1, 0.0)
    h = jnp.maximum(h @ w2 + b2, 0.0)
    h = jnp.maximum(h @ w3 + b3, 0.0)
    return jnp.tanh(h @ w4 + b4)


if __name__ == "__main__":
    key = jax.random.PRNGKey(0)
    key, kx = jax.random.split(key)

    batch, state_dim, action_dim = 2, 8, 2
    x = jax.random.normal(kx, (batch, state_dim), dtype=jnp.float32)
    params = init_actor_params(key, state_dim=state_dim, action_dim=action_dim)

    # bf16 epilogue (bias/ReLU/tanh) only where the VPU/EUP support it.
    bias_dtype = jnp.bfloat16 if _bf16_vpu_available() else jnp.float32
    prepared = prepare_params(params, bias_dtype=bias_dtype)

    # Tolerance reflects bf16 MXU inputs, bf16 epilogue (v6e/v7x) and bf16 output.
    TOL = 3e-2

    # Small online-inference batch (single 8-row tile).
    out = jax.block_until_ready(actor_net_forward(x, prepared, action_dim))
    ref = reference_forward(x, params)
    assert out.shape == (batch, action_dim)
    assert jnp.allclose(out, ref, atol=TOL, rtol=TOL), "small-batch mismatch"

    # Larger batch to exercise the pipelined, megacore-split batch grid (2 tiles).
    key, kb = jax.random.split(key)
    xb = jax.random.normal(kb, (512, state_dim), dtype=jnp.float32)
    outb = jax.block_until_ready(actor_net_forward(xb, prepared, action_dim))
    refb = reference_forward(xb, params)
    assert outb.shape == (512, action_dim)
    assert jnp.allclose(outb, refb, atol=TOL, rtol=TOL), "large-batch mismatch"

    print("KERNEL_OK")
</pallas_src>

<mosaic_0001>
module attributes {stable_mosaic.version = 11 : i64} {
  func.func @actor_net_kernel(%arg0: i32, %arg1: memref<8x128xbf16, #tpu.memory_space<vmem>>, %arg2: memref<128x256xbf16, #tpu.memory_space<vmem>>, %arg3: memref<1x256xbf16, #tpu.memory_space<vmem>>, %arg4: memref<256x512xbf16, #tpu.memory_space<vmem>>, %arg5: memref<1x512xbf16, #tpu.memory_space<vmem>>, %arg6: memref<512x256xbf16, #tpu.memory_space<vmem>>, %arg7: memref<1x256xbf16, #tpu.memory_space<vmem>>, %arg8: memref<256x128xbf16, #tpu.memory_space<vmem>>, %arg9: memref<1x128xbf16, #tpu.memory_space<vmem>>, %arg10: memref<8x128xbf16, #tpu.memory_space<vmem>>) attributes {dimension_semantics = [#tpu.dimension_semantics<parallel>], iteration_bounds = array<i64: 1>, scalar_prefetch = 0 : i64, scratch_operands = 0 : i64, tpu.core_type = #tpu.core_type<tc>, window_params = [{transform_indices = @transform_0, window_bounds = array<i64: 8, 128>}, {pipeline_mode = #tpu.pipeline_mode<synchronous>, transform_indices = @transform_1, window_bounds = array<i64: 128, 256>}, {pipeline_mode = #tpu.pipeline_mode<synchronous>, transform_indices = @transform_2, window_bounds = array<i64: 1, 256>}, {pipeline_mode = #tpu.pipeline_mode<synchronous>, transform_indices = @transform_3, window_bounds = array<i64: 256, 512>}, {pipeline_mode = #tpu.pipeline_mode<synchronous>, transform_indices = @transform_4, window_bounds = array<i64: 1, 512>}, {pipeline_mode = #tpu.pipeline_mode<synchronous>, transform_indices = @transform_5, window_bounds = array<i64: 512, 256>}, {pipeline_mode = #tpu.pipeline_mode<synchronous>, transform_indices = @transform_6, window_bounds = array<i64: 1, 256>}, {pipeline_mode = #tpu.pipeline_mode<synchronous>, transform_indices = @transform_7, window_bounds = array<i64: 256, 128>}, {pipeline_mode = #tpu.pipeline_mode<synchronous>, transform_indices = @transform_8, window_bounds = array<i64: 1, 128>}, {transform_indices = @transform_9, window_bounds = array<i64: 8, 128>}]} {
    %c0 = arith.constant 0 : index
    %c0_0 = arith.constant 0 : index
    %0 = vector.load %arg1[%c0, %c0_0] : memref<8x128xbf16, #tpu.memory_space<vmem>>, vector<8x128xbf16>
    %c0_1 = arith.constant 0 : index
    %c0_2 = arith.constant 0 : index
    %1 = vector.load %arg2[%c0_1, %c0_2] : memref<128x256xbf16, #tpu.memory_space<vmem>>, vector<128x256xbf16>
    %cst = arith.constant dense<0.000000e+00> : vector<8x256xf32>
    %2 = tpu.matmul %0, %1, %cst {dimension_numbers = #tpu.dot_dimension_numbers<[1], [0], [0], [1], [0, 0, 1, 1], [], []>} : vector<8x128xbf16>, vector<128x256xbf16>, vector<8x256xf32> -> vector<8x256xf32>
    %3 = arith.truncf %2 : vector<8x256xf32> to vector<8x256xbf16>
    %c0_3 = arith.constant 0 : index
    %c0_4 = arith.constant 0 : index
    %4 = vector.load %arg3[%c0_3, %c0_4] : memref<1x256xbf16, #tpu.memory_space<vmem>>, vector<1x256xbf16>
    %5 = vector.broadcast %4 : vector<1x256xbf16> to vector<8x256xbf16>
    %6 = arith.addf %3, %5 : vector<8x256xbf16>
    %cst_5 = arith.constant 0.000000e+00 : bf16
    %7 = vector.broadcast %cst_5 : bf16 to vector<8x256xbf16>
    %8 = arith.maximumf %6, %7 : vector<8x256xbf16>
    %c0_6 = arith.constant 0 : index
    %c0_7 = arith.constant 0 : index
    %9 = vector.load %arg4[%c0_6, %c0_7] : memref<256x512xbf16, #tpu.memory_space<vmem>>, vector<256x512xbf16>
    %cst_8 = arith.constant dense<0.000000e+00> : vector<8x512xf32>
    %10 = tpu.matmul %8, %9, %cst_8 {dimension_numbers = #tpu.dot_dimension_numbers<[1], [0], [0], [1], [0, 0, 1, 1], [], []>} : vector<8x256xbf16>, vector<256x512xbf16>, vector<8x512xf32> -> vector<8x512xf32>
    %11 = arith.truncf %10 : vector<8x512xf32> to vector<8x512xbf16>
    %c0_9 = arith.constant 0 : index
    %c0_10 = arith.constant 0 : index
    %12 = vector.load %arg5[%c0_9, %c0_10] : memref<1x512xbf16, #tpu.memory_space<vmem>>, vector<1x512xbf16>
    %13 = vector.broadcast %12 : vector<1x512xbf16> to vector<8x512xbf16>
    %14 = arith.addf %11, %13 : vector<8x512xbf16>
    %cst_11 = arith.constant 0.000000e+00 : bf16
    %15 = vector.broadcast %cst_11 : bf16 to vector<8x512xbf16>
    %16 = arith.maximumf %14, %15 : vector<8x512xbf16>
    %c0_12 = arith.constant 0 : index
    %c0_13 = arith.constant 0 : index
    %17 = vector.load %arg6[%c0_12, %c0_13] : memref<512x256xbf16, #tpu.memory_space<vmem>>, vector<512x256xbf16>
    %cst_14 = arith.constant dense<0.000000e+00> : vector<8x256xf32>
    %18 = tpu.matmul %16, %17, %cst_14 {dimension_numbers = #tpu.dot_dimension_numbers<[1], [0], [0], [1], [0, 0, 1, 1], [], []>} : vector<8x512xbf16>, vector<512x256xbf16>, vector<8x256xf32> -> vector<8x256xf32>
    %19 = arith.truncf %18 : vector<8x256xf32> to vector<8x256xbf16>
    %c0_15 = arith.constant 0 : index
    %c0_16 = arith.constant 0 : index
    %20 = vector.load %arg7[%c0_15, %c0_16] : memref<1x256xbf16, #tpu.memory_space<vmem>>, vector<1x256xbf16>
    %21 = vector.broadcast %20 : vector<1x256xbf16> to vector<8x256xbf16>
    %22 = arith.addf %19, %21 : vector<8x256xbf16>
    %cst_17 = arith.constant 0.000000e+00 : bf16
    %23 = vector.broadcast %cst_17 : bf16 to vector<8x256xbf16>
    %24 = arith.maximumf %22, %23 : vector<8x256xbf16>
    %c0_18 = arith.constant 0 : index
    %c0_19 = arith.constant 0 : index
    %25 = vector.load %arg8[%c0_18, %c0_19] : memref<256x128xbf16, #tpu.memory_space<vmem>>, vector<256x128xbf16>
    %cst_20 = arith.constant dense<0.000000e+00> : vector<8x128xf32>
    %26 = tpu.matmul %24, %25, %cst_20 {dimension_numbers = #tpu.dot_dimension_numbers<[1], [0], [0], [1], [0, 0, 1, 1], [], []>} : vector<8x256xbf16>, vector<256x128xbf16>, vector<8x128xf32> -> vector<8x128xf32>
    %27 = arith.truncf %26 : vector<8x128xf32> to vector<8x128xbf16>
    %c0_21 = arith.constant 0 : index
    %c0_22 = arith.constant 0 : index
    %28 = vector.load %arg9[%c0_21, %c0_22] : memref<1x128xbf16, #tpu.memory_space<vmem>>, vector<1x128xbf16>
    %29 = vector.broadcast %28 : vector<1x128xbf16> to vector<8x128xbf16>
    %30 = arith.addf %27, %29 : vector<8x128xbf16>
    %31 = math.tanh %30 : vector<8x128xbf16>
    %c0_23 = arith.constant 0 : index
    %c0_24 = arith.constant 0 : index
    %32 = vector.load %arg10[%c0_23, %c0_24] : memref<8x128xbf16, #tpu.memory_space<vmem>>, vector<8x128xbf16>
    tpu.vector_store %arg10[%c0_23, %c0_24], %31 {strides = array<i32>} : memref<8x128xbf16, #tpu.memory_space<vmem>>, vector<8x128xbf16>,
    return
  }
  func.func @transform_0(%arg0: i32) -> (i32, i32) {
    %c0_i32 = arith.constant 0 : i32
    %c0_i32_0 = arith.constant 0 : i32
    return %arg0, %c0_i32 : i32, i32
  }
  func.func @transform_1(%arg0: i32) -> (i32, i32) {
    %c0_i32 = arith.constant 0 : i32
    %c0_i32_0 = arith.constant 0 : i32
    %c0_i32_1 = arith.constant 0 : i32
    return %c0_i32, %c0_i32_0 : i32, i32
  }
  func.func @transform_2(%arg0: i32) -> (i32, i32) {
    %c0_i32 = arith.constant 0 : i32
    %c0_i32_0 = arith.constant 0 : i32
    %c0_i32_1 = arith.constant 0 : i32
    return %c0_i32, %c0_i32_0 : i32, i32
  }
  func.func @transform_3(%arg0: i32) -> (i32, i32) {
    %c0_i32 = arith.constant 0 : i32
    %c0_i32_0 = arith.constant 0 : i32
    %c0_i32_1 = arith.constant 0 : i32
    return %c0_i32, %c0_i32_0 : i32, i32
  }
  func.func @transform_4(%arg0: i32) -> (i32, i32) {
    %c0_i32 = arith.constant 0 : i32
    %c0_i32_0 = arith.constant 0 : i32
    %c0_i32_1 = arith.constant 0 : i32
    return %c0_i32, %c0_i32_0 : i32, i32
  }
  func.func @transform_5(%arg0: i32) -> (i32, i32) {
    %c0_i32 = arith.constant 0 : i32
    %c0_i32_0 = arith.constant 0 : i32
    %c0_i32_1 = arith.constant 0 : i32
    return %c0_i32, %c0_i32_0 : i32, i32
  }
  func.func @transform_6(%arg0: i32) -> (i32, i32) {
    %c0_i32 = arith.constant 0 : i32
    %c0_i32_0 = arith.constant 0 : i32
    %c0_i32_1 = arith.constant 0 : i32
    return %c0_i32, %c0_i32_0 : i32, i32
  }
  func.func @transform_7(%arg0: i32) -> (i32, i32) {
    %c0_i32 = arith.constant 0 : i32
    %c0_i32_0 = arith.constant 0 : i32
    %c0_i32_1 = arith.constant 0 : i32
    return %c0_i32, %c0_i32_0 : i32, i32
  }
  func.func @transform_8(%arg0: i32) -> (i32, i32) {
    %c0_i32 = arith.constant 0 : i32
    %c0_i32_0 = arith.constant 0 : i32
    %c0_i32_1 = arith.constant 0 : i32
    return %c0_i32, %c0_i32_0 : i32, i32
  }
  func.func @transform_9(%arg0: i32) -> (i32, i32) {
    %c0_i32 = arith.constant 0 : i32
    %c0_i32_0 = arith.constant 0 : i32
    return %arg0, %c0_i32 : i32, i32
  }
}

</mosaic_0001>

<llo_original>
// kernel: tpu_custom_call.1
$region0: #{tpu_custom_call.1}
  #allocation0 [shape = 'u32[]', space=smem, size = 0x4, offset = 0x4, fixed_abs, tag = 'smem constant byte address 0x4 - core index']
  #allocation1 [shape = 'u32[144,128]{1,0:T(1,128)}', space=vmem, size = 0x12000, scoped, tag = 'internal scratch']
  %s0 = inlined_call_operand.hbm [shape: bf16[8,128], index: 0, kind: input, shape index: {}]
  %s1 = inlined_call_operand.hbm [shape: bf16[128,256], index: 1, kind: input, shape index: {}]
  %s2 = inlined_call_operand.vmem [shape: bf16[1,256], index: 2, kind: input, shape index: {}]
  %s3 = inlined_call_operand.hbm [shape: bf16[256,512], index: 3, kind: input, shape index: {}]
  %s4 = inlined_call_operand.vmem [shape: bf16[1,512], index: 4, kind: input, shape index: {}]
  %s5 = inlined_call_operand.hbm [shape: bf16[512,256], index: 5, kind: input, shape index: {}]
  %s6 = inlined_call_operand.vmem [shape: bf16[1,256], index: 6, kind: input, shape index: {}]
  %s7 = inlined_call_operand.hbm [shape: bf16[256,128], index: 7, kind: input, shape index: {}]
  %s8 = inlined_call_operand.vmem [shape: bf16[1,128], index: 8, kind: input, shape index: {}]
  %s9 = inlined_call_operand.hbm [shape: bf16[8,128], index: 9, kind: output, shape index: {}]
  %s10 = sld [smem:[#allocation0]]
  $region66: #{tpu_custom_call.1} parent=0
    _
  %s12 = ssub.s32 1, %s10
  %s13 = scalar_select 0, %s12, %s10
  $region1: #{tpu_custom_call.1} parent=0
    #allocation2 [shape = 'u8[2048]{0}', space=vmem, size = 0x800, scoped, tag = 'input window, operand 0, single buffered']
    #allocation3 [shape = 's32[1]{0}', space=sflag, size = 0x4, scoped, tag = 'scoped memory for tpu_custom_call.1']
    #allocation4 [shape = 's32[1]{0}', space=sflag, size = 0x4, scoped, tag = 'scoped memory for tpu_custom_call.1']
    #allocation5 [shape = 'u8[65536]{0}', space=vmem, size = 0x10000, scoped, tag = 'input window, operand 1, single buffered']
    #allocation6 [shape = 's32[1]{0}', space=sflag, size = 0x4, scoped, tag = 'scoped memory for tpu_custom_call.1']
    #allocation7 [shape = 'u8[262144]{0}', space=vmem, size = 0x40000, scoped, tag = 'input window, operand 3, single buffered']
    #allocation8 [shape = 'u8[262144]{0}', space=vmem, size = 0x40000, scoped, tag = 'input window, operand 5, single buffered']
    #allocation9 [shape = 's32[1]{0}', space=sflag, size = 0x4, scoped, tag = 'scoped memory for tpu_custom_call.1']
    #allocation10 [shape = 'u8[65536]{0}', space=vmem, size = 0x10000, scoped, tag = 'input window, operand 7, single buffered']
    #allocation11 [shape = 'u8[2048]{0}', space=vmem, size = 0x800, scoped, tag = 'output window, operand 0, single buffered']
    %14 = vsyncpa [#allocation3], 0
    %15 = vsyncpa [#allocation6], 0
    %16 = vsyncpa [#allocation9], 0
    %17 = vsyncpa [#allocation4], 0
    // Predicated region
    $region2: #{tpu_custom_call.1} parent=1 // pred_check
      _
    $region3: #{tpu_custom_call.1} parent=1 // pred_check_branch
      %19 = sbr.rel (0) target = $region5
    $region4: #{tpu_custom_call.1} parent=1 // pred_region
      %s21 = ssub.s32 64, 64
      %22 = vsyncadd [#allocation3], %s21
      %s24 = sshll.u32 [#allocation2], 4
      %s25 = int_to_ptr.vmem [resolvable:$true] %s24
      %27 = dma.hbm_to_vmem [thread:$0]  %s0, 64, %s25, [#allocation3]
    $region5: #{tpu_custom_call.1} parent=1 // pred_fallthru
      _
    // Predicated region
    $region6: #{tpu_custom_call.1} parent=1 // pred_check
      _
    $region7: #{tpu_custom_call.1} parent=1 // pred_check_branch
      %29 = sbr.rel (0) target = $region9
    $region8: #{tpu_custom_call.1} parent=1 // pred_region
      %s31 = ssub.s32 2048, 2048
      %32 = vsyncadd [#allocation6], %s31
      %s33 = sshll.u32 [#allocation5], 4
      %s34 = int_to_ptr.vmem [resolvable:$true] %s33
      %39 = dma.hbm_to_vmem [thread:$0]  %s1, 2048, %s34, [#allocation6], 128, 128, 8
    $region9: #{tpu_custom_call.1} parent=1 // pred_fallthru
      _
    // Predicated region
    $region10: #{tpu_custom_call.1} parent=1 // pred_check
      _
    $region11: #{tpu_custom_call.1} parent=1 // pred_check_branch
      %41 = sbr.rel (0) target = $region13
    $region12: #{tpu_custom_call.1} parent=1 // pred_region
      _
    $region13: #{tpu_custom_call.1} parent=1 // pred_fallthru
      _
    // Predicated region
    $region14: #{tpu_custom_call.1} parent=1 // pred_check
      _
    $region15: #{tpu_custom_call.1} parent=1 // pred_check_branch
      %43 = sbr.rel (0) target = $region17
    $region16: #{tpu_custom_call.1} parent=1 // pred_region
      %s45 = ssub.s32 8192, 8192
      %46 = vsyncadd [#allocation6], %s45
      %s47 = sshll.u32 [#allocation7], 4
      %s48 = int_to_ptr.vmem [resolvable:$true] %s47
      %53 = dma.hbm_to_vmem [thread:$0]  %s3, 8192, %s48, [#allocation6], 256, 256, 16
    $region17: #{tpu_custom_call.1} parent=1 // pred_fallthru
      _
    // Predicated region
    $region18: #{tpu_custom_call.1} parent=1 // pred_check
      _
    $region19: #{tpu_custom_call.1} parent=1 // pred_check_branch
      %55 = sbr.rel (0) target = $region21
    $region20: #{tpu_custom_call.1} parent=1 // pred_region
      _
    $region21: #{tpu_custom_call.1} parent=1 // pred_fallthru
      _
    // Predicated region
    $region22: #{tpu_custom_call.1} parent=1 // pred_check
      _
    $region23: #{tpu_custom_call.1} parent=1 // pred_check_branch
      %57 = sbr.rel (0) target = $region25
    $region24: #{tpu_custom_call.1} parent=1 // pred_region
      %s59 = ssub.s32 8192, 8192
      %60 = vsyncadd [#allocation9], %s59
      %s61 = sshll.u32 [#allocation8], 4
      %s62 = int_to_ptr.vmem [resolvable:$true] %s61
      %67 = dma.hbm_to_vmem [thread:$0]  %s5, 8192, %s62, [#allocation9], 128, 128, 8
    $region25: #{tpu_custom_call.1} parent=1 // pred_fallthru
      _
    // Predicated region
    $region26: #{tpu_custom_call.1} parent=1 // pred_check
      _
    $region27: #{tpu_custom_call.1} parent=1 // pred_check_branch
      %69 = sbr.rel (0) target = $region29
    $region28: #{tpu_custom_call.1} parent=1 // pred_region
      _
    $region29: #{tpu_custom_call.1} parent=1 // pred_fallthru
      _
    // Predicated region
    $region30: #{tpu_custom_call.1} parent=1 // pred_check
      _
    $region31: #{tpu_custom_call.1} parent=1 // pred_check_branch
      %71 = sbr.rel (0) target = $region33
    $region32: #{tpu_custom_call.1} parent=1 // pred_region
      %s73 = ssub.s32 2048, 2048
      %74 = vsyncadd [#allocation9], %s73
      %s75 = sshll.u32 [#allocation10], 4
      %s76 = int_to_ptr.vmem [resolvable:$true] %s75
      %81 = dma.hbm_to_vmem [thread:$0]  %s7, 2048, %s76, [#allocation9], 64, 64, 4
    $region33: #{tpu_custom_call.1} parent=1 // pred_fallthru
      _
    // Predicated region
    $region34: #{tpu_custom_call.1} parent=1 // pred_check
      _
    $region35: #{tpu_custom_call.1} parent=1 // pred_check_branch
      %83 = sbr.rel (0) target = $region37
    $region36: #{tpu_custom_call.1} parent=1 // pred_region
      _
    $region37: #{tpu_custom_call.1} parent=1 // pred_fallthru
      _
    // Predicated region
    $region38: #{tpu_custom_call.1} parent=1 // pred_check
      _
    $region39: #{tpu_custom_call.1} parent=1 // pred_check_branch
      %85 = sbr.rel (0) target = $region41
    $region40: #{tpu_custom_call.1} parent=1 // pred_region
      %86 = dma.done [#allocation3], 64
    $region41: #{tpu_custom_call.1} parent=1 // pred_fallthru
      _
    // Predicated region
    $region42: #{tpu_custom_call.1} parent=1 // pred_check
      _
    $region43: #{tpu_custom_call.1} parent=1 // pred_check_branch
      %88 = sbr.rel (0) target = $region45
    $region44: #{tpu_custom_call.1} parent=1 // pred_region
      %89 = dma.done [#allocation6], 2048
    $region45: #{tpu_custom_call.1} parent=1 // pred_fallthru
      _
    // Predicated region
    $region46: #{tpu_custom_call.1} parent=1 // pred_check
      _
    $region47: #{tpu_custom_call.1} parent=1 // pred_check_branch
      %91 = sbr.rel (0) target = $region49
    $region48: #{tpu_custom_call.1} parent=1 // pred_region
      %92 = dma.done [#allocation6], 8192
    $region49: #{tpu_custom_call.1} parent=1 // pred_fallthru
      _
    // Predicated region
    $region50: #{tpu_custom_call.1} parent=1 // pred_check
      _
    $region51: #{tpu_custom_call.1} parent=1 // pred_check_branch
      %94 = sbr.rel (0) target = $region53
    $region52: #{tpu_custom_call.1} parent=1 // pred_region
      %95 = dma.done [#allocation9], 8192
    $region53: #{tpu_custom_call.1} parent=1 // pred_fallthru
      _
    // Predicated region
    $region54: #{tpu_custom_call.1} parent=1 // pred_check
      _
    $region55: #{tpu_custom_call.1} parent=1 // pred_check_branch
      %97 = sbr.rel (0) target = $region57
    $region56: #{tpu_custom_call.1} parent=1 // pred_region
      %98 = dma.done [#allocation9], 2048
    $region57: #{tpu_custom_call.1} parent=1 // pred_fallthru
      _
    %v100 = vld [vmem:[#allocation2] sm:$0xf]
    %v101 = vld [vmem:[#allocation5] sm:$0xff]
    %v102 = vld [vmem:[#allocation5 + $0x8] sm:$0xff]
    %v103 = vld [vmem:[#allocation5 + $0x10] sm:$0xff]
    %v104 = vld [vmem:[#allocation5 + $0x18] sm:$0xff]
    %v105 = vld [vmem:[#allocation5 + $0x20] sm:$0xff]
    %v106 = vld [vmem:[#allocation5 + $0x28] sm:$0xff]
    %v107 = vld [vmem:[#allocation5 + $0x30] sm:$0xff]
    %v108 = vld [vmem:[#allocation5 + $0x38] sm:$0xff]
    %v109 = vld [vmem:[#allocation5 + $0x40] sm:$0xff]
    %v110 = vld [vmem:[#allocation5 + $0x48] sm:$0xff]
    %v111 = vld [vmem:[#allocation5 + $0x50] sm:$0xff]
    %v112 = vld [vmem:[#allocation5 + $0x58] sm:$0xff]
    %v113 = vld [vmem:[#allocation5 + $0x60] sm:$0xff]
    %v114 = vld [vmem:[#allocation5 + $0x68] sm:$0xff]
    %v115 = vld [vmem:[#allocation5 + $0x70] sm:$0xff]
    %v116 = vld [vmem:[#allocation5 + $0x78] sm:$0xff]
    %v133 = vunpack.c.l.b16 %v101
    %v134 = vunpack.c.h.b16 %v101
    %v135 = vunpack.c.l.b16 %v102
    %v136 = vunpack.c.h.b16 %v102
    %v137 = vunpack.c.l.b16 %v103
    %v138 = vunpack.c.h.b16 %v103
    %v139 = vunpack.c.l.b16 %v104
    %v140 = vunpack.c.h.b16 %v104
    %v141 = vunpack.c.l.b16 %v105
    %v142 = vunpack.c.h.b16 %v105
    %v143 = vunpack.c.l.b16 %v106
    %v144 = vunpack.c.h.b16 %v106
    %v145 = vunpack.c.l.b16 %v107
    %v146 = vunpack.c.h.b16 %v107
    %v147 = vunpack.c.l.b16 %v108
    %v148 = vunpack.c.h.b16 %v108
    %v149 = vunpack.c.l.b16 %v109
    %v150 = vunpack.c.h.b16 %v109
    %v151 = vunpack.c.l.b16 %v110
    %v152 = vunpack.c.h.b16 %v110
    %v153 = vunpack.c.l.b16 %v111
    %v154 = vunpack.c.h.b16 %v111
    %v155 = vunpack.c.l.b16 %v112
    %v156 = vunpack.c.h.b16 %v112
    %v157 = vunpack.c.l.b16 %v113
    %v158 = vunpack.c.h.b16 %v113
    %v159 = vunpack.c.l.b16 %v114
    %v160 = vunpack.c.h.b16 %v114
    %v161 = vunpack.c.l.b16 %v115
    %v162 = vunpack.c.h.b16 %v115
    %v163 = vunpack.c.l.b16 %v116
    %v164 = vunpack.c.h.b16 %v116
    %v165 = vpack.c.b16 %v135, %v133
    %v166 = vpack.c.b16 %v136, %v134
    %v167 = vpack.c.b16 %v139, %v137
    %v168 = vpack.c.b16 %v140, %v138
    %v169 = vpack.c.b16 %v143, %v141
    %v170 = vpack.c.b16 %v144, %v142
    %v171 = vpack.c.b16 %v147, %v145
    %v172 = vpack.c.b16 %v148, %v146
    %v173 = vpack.c.b16 %v151, %v149
    %v174 = vpack.c.b16 %v152, %v150
    %v175 = vpack.c.b16 %v155, %v153
    %v176 = vpack.c.b16 %v156, %v154
    %v177 = vpack.c.b16 %v159, %v157
    %v178 = vpack.c.b16 %v160, %v158
    %v179 = vpack.c.b16 %v163, %v161
    %v180 = vpack.c.b16 %v164, %v162
    %197 = vmatprep.subr.bf16.mxu0 %v166
    %198 = vmatpush1.bf16.msra.mxu0 %v165
    %199 = vmatprep.subr.bf16.mxu0 %v168
    %200 = vmatpush1.bf16.msra.mxu0 %v167
    %201 = vmatprep.subr.bf16.mxu0 %v170
    %202 = vmatpush1.bf16.msra.mxu0 %v169
    %203 = vmatprep.subr.bf16.mxu0 %v172
    %204 = vmatpush1.bf16.msra.mxu0 %v171
    %205 = vmatprep.subr.bf16.mxu0 %v174
    %206 = vmatpush1.bf16.msra.mxu0 %v173
    %207 = vmatprep.subr.bf16.mxu0 %v176
    %208 = vmatpush1.bf16.msra.mxu0 %v175
    %209 = vmatprep.subr.bf16.mxu0 %v178
    %210 = vmatpush1.bf16.msra.mxu0 %v177
    %211 = vmatprep.subr.bf16.mxu0 %v180
    %212 = vmatpush1.bf16.msra.mxu0 %v179
    %213 = vmatprep.subr.bf16.mxu0 0
    %214 = vmatpush1.bf16.msra.mxu0 0
    %215 = vmatprep.subr.bf16.mxu0 0
    %216 = vmatpush1.bf16.msra.mxu0 0
    %217 = vmatprep.subr.bf16.mxu0 0
    %218 = vmatpush1.bf16.msra.mxu0 0
    %219 = vmatprep.subr.bf16.mxu0 0
    %220 = vmatpush1.bf16.msra.mxu0 0
    %221 = vmatprep.subr.bf16.mxu0 0
    %222 = vmatpush1.bf16.msra.mxu0 0
    %223 = vmatprep.subr.bf16.mxu0 0
    %224 = vmatpush1.bf16.msra.mxu0 0
    %225 = vmatprep.subr.bf16.mxu0 0
    %226 = vmatpush1.bf16.msra.mxu0 0
    %227 = vmatprep.subr.bf16.mxu0 0
    %228 = vmatpush1.bf16.msra.mxu0 0
    %229 = vmatprep.mubr.bf16.mxu0 0
    %230 = vmatmul.mubr.bf16.gmra.mrb[0].mxu0 %v100
    %v231 = vpop.f32.mrb[0].mxu0
    %v232 = vadd.f32 0.0, %v231
    %v233 = vpop.f32.mrb[0].mxu0
    %v234 = vadd.f32 0.0, %v233
    %v235 = vpop.f32.mrb[0].mxu0
    %v236 = vpop.f32.mrb[0].mxu0
    %237 = vdwg.mxu0
    %v238 = vpack.c.bf16 %v232, %v232
    %v239 = vpack.c.bf16 %v234, %v234
    %v240 = vld [vmem:[%s2] sm:$0x3]
    %v243 = vunpack.c.l.s4 1966171168
    %v244 = vunpack.c.0.s8 %v243
    %v245 = vlaneseq
    %v246 = vshrl.u32 %v245, 7
    %v247 = vsub.s32 %v244, %v246
    %v248 = vrot.slane %v240, %v247
    %v249 = vcombine.high %v248, %v248
    %v251 = vunpack.c.l.s4 1966171168
    %v252 = vunpack.c.0.s8 %v251
    %v253 = vlaneseq
    %v254 = vshrl.u32 %v253, 7
    %v255 = vsub.s32 %v252, %v254
    %v256 = vrot.slane %v248, %v255
    %v258 = vunpack.c.l.s4 1966171168
    %v259 = vunpack.c.0.s8 %v258
    %v260 = vlaneseq
    %v261 = vshrl.u32 %v260, 7
    %v262 = vsub.s32 %v259, %v261
    %v263 = vrot.slane %v249, %v262
    %v265 = vpack.i.b16 %v256, %v256
    %v267 = vlaneseq
    %v268 = vshrl.u32 %v267, 7
    %v269 = vsub.s32 0, %v268
    %v270 = vrot.slane %v265, %v269
    %v272 = vpack.i.b16 %v263, %v263
    %v274 = vlaneseq
    %v275 = vshrl.u32 %v274, 7
    %v276 = vsub.s32 0, %v275
    %v277 = vrot.slane %v272, %v276
    %v278 = vadd.bf16 %v238, %v270
    %v279 = vadd.bf16 %v239, %v277
    %v280 = vmax.bf16 %v278, 0
    %v281 = vmax.bf16 %v279, 0
    %v282 = vld [vmem:[#allocation7] sm:$0xff]
    %v283 = vld [vmem:[#allocation7 + $0x8] sm:$0xff]
    %v284 = vld [vmem:[#allocation7 + $0x10] sm:$0xff]
    %v285 = vld [vmem:[#allocation7 + $0x18] sm:$0xff]
    %v286 = vld [vmem:[#allocation7 + $0x20] sm:$0xff]
    %v287 = vld [vmem:[#allocation7 + $0x28] sm:$0xff]
    %v288 = vld [vmem:[#allocation7 + $0x30] sm:$0xff]
    %v289 = vld [vmem:[#allocation7 + $0x38] sm:$0xff]
    %v290 = vld [vmem:[#allocation7 + $0x40] sm:$0xff]
    %v291 = vld [vmem:[#allocation7 + $0x48] sm:$0xff]
    %v292 = vld [vmem:[#allocation7 + $0x50] sm:$0xff]
    %v293 = vld [vmem:[#allocation7 + $0x58] sm:$0xff]
    %v294 = vld [vmem:[#allocation7 + $0x60] sm:$0xff]
    %v295 = vld [vmem:[#allocation7 + $0x68] sm:$0xff]
    %v296 = vld [vmem:[#allocation7 + $0x70] sm:$0xff]
    %v297 = vld [vmem:[#allocation7 + $0x78] sm:$0xff]
    %v298 = vld [vmem:[#allocation7 + $0x80] sm:$0xff]
    %v299 = vld [vmem:[#allocation7 + $0x88] sm:$0xff]
    %v300 = vld [vmem:[#allocation7 + $0x90] sm:$0xff]
    %v301 = vld [vmem:[#allocation7 + $0x98] sm:$0xff]
    %v302 = vld [vmem:[#allocation7 + $0xa0] sm:$0xff]
    %v303 = vld [vmem:[#allocation7 + $0xa8] sm:$0xff]
    %v304 = vld [vmem:[#allocation7 + $0xb0] sm:$0xff]
    %v305 = vld [vmem:[#allocation7 + $0xb8] sm:$0xff]
    %v306 = vld [vmem:[#allocation7 + $0xc0] sm:$0xff]
    %v307 = vld [vmem:[#allocation7 + $0xc8] sm:$0xff]
    %v308 = vld [vmem:[#allocation7 + $0xd0] sm:$0xff]
    %v309 = vld [vmem:[#allocation7 + $0xd8] sm:$0xff]
    %v310 = vld [vmem:[#allocation7 + $0xe0] sm:$0xff]
    %v311 = vld [vmem:[#allocation7 + $0xe8] sm:$0xff]
    %v312 = vld [vmem:[#allocation7 + $0xf0] sm:$0xff]
    %v313 = vld [vmem:[#allocation7 + $0xf8] sm:$0xff]
    %v314 = vld [vmem:[#allocation7 + $0x100] sm:$0xff]
    %v315 = vld [vmem:[#allocation7 + $0x108] sm:$0xff]
    %v316 = vld [vmem:[#allocation7 + $0x110] sm:$0xff]
    %v317 = vld [vmem:[#allocation7 + $0x118] sm:$0xff]
    %v318 = vld [vmem:[#allocation7 + $0x120] sm:$0xff]
    %v319 = vld [vmem:[#allocation7 + $0x128] sm:$0xff]
    %v320 = vld [vmem:[#allocation7 + $0x130] sm:$0xff]
    %v321 = vld [vmem:[#allocation7 + $0x138] sm:$0xff]
    %v322 = vld [vmem:[#allocation7 + $0x140] sm:$0xff]
    %v323 = vld [vmem:[#allocation7 + $0x148] sm:$0xff]
    %v324 = vld [vmem:[#allocation7 + $0x150] sm:$0xff]
    %v325 = vld [vmem:[#allocation7 + $0x158] sm:$0xff]
    %v326 = vld [vmem:[#allocation7 + $0x160] sm:$0xff]
    %v327 = vld [vmem:[#allocation7 + $0x168] sm:$0xff]
    %v328 = vld [vmem:[#allocation7 + $0x170] sm:$0xff]
    %v329 = vld [vmem:[#allocation7 + $0x178] sm:$0xff]
    %v330 = vld [vmem:[#allocation7 + $0x180] sm:$0xff]
    %v331 = vld [vmem:[#allocation7 + $0x188] sm:$0xff]
    %v332 = vld [vmem:[#allocation7 + $0x190] sm:$0xff]
    %v333 = vld [vmem:[#allocation7 + $0x198] sm:$0xff]
    %v334 = vld [vmem:[#allocation7 + $0x1a0] sm:$0xff]
    %v335 = vld [vmem:[#allocation7 + $0x1a8] sm:$0xff]
    %v336 = vld [vmem:[#allocation7 + $0x1b0] sm:$0xff]
    %v337 = vld [vmem:[#allocation7 + $0x1b8] sm:$0xff]
    %v338 = vld [vmem:[#allocation7 + $0x1c0] sm:$0xff]
    %v339 = vld [vmem:[#allocation7 + $0x1c8] sm:$0xff]
    %v340 = vld [vmem:[#allocation7 + $0x1d0] sm:$0xff]
    %v341 = vld [vmem:[#allocation7 + $0x1d8] sm:$0xff]
    %v342 = vld [vmem:[#allocation7 + $0x1e0] sm:$0xff]
    %v343 = vld [vmem:[#allocation7 + $0x1e8] sm:$0xff]
    %v344 = vld [vmem:[#allocation7 + $0x1f0] sm:$0xff]
    %v345 = vld [vmem:[#allocation7 + $0x1f8] sm:$0xff]
    %v410 = vunpack.c.l.b16 %v282
    %v411 = vunpack.c.h.b16 %v282
    %v412 = vunpack.c.l.b16 %v283
    %v413 = vunpack.c.h.b16 %v283
    %v414 = vunpack.c.l.b16 %v284
    %v415 = vunpack.c.h.b16 %v284
    %v416 = vunpack.c.l.b16 %v285
    %v417 = vunpack.c.h.b16 %v285
    %v418 = vunpack.c.l.b16 %v286
    %v419 = vunpack.c.h.b16 %v286
    %v420 = vunpack.c.l.b16 %v287
    %v421 = vunpack.c.h.b16 %v287
    %v422 = vunpack.c.l.b16 %v288
    %v423 = vunpack.c.h.b16 %v288
    %v424 = vunpack.c.l.b16 %v289
    %v425 = vunpack.c.h.b16 %v289
    %v426 = vunpack.c.l.b16 %v290
    %v427 = vunpack.c.h.b16 %v290
    %v428 = vunpack.c.l.b16 %v291
    %v429 = vunpack.c.h.b16 %v291
    %v430 = vunpack.c.l.b16 %v292
    %v431 = vunpack.c.h.b16 %v292
    %v432 = vunpack.c.l.b16 %v293
    %v433 = vunpack.c.h.b16 %v293
    %v434 = vunpack.c.l.b16 %v294
    %v435 = vunpack.c.h.b16 %v294
    %v436 = vunpack.c.l.b16 %v295
    %v437 = vunpack.c.h.b16 %v295
    %v438 = vunpack.c.l.b16 %v296
    %v439 = vunpack.c.h.b16 %v296
    %v440 = vunpack.c.l.b16 %v297
    %v441 = vunpack.c.h.b16 %v297
    %v442 = vunpack.c.l.b16 %v298
    %v443 = vunpack.c.h.b16 %v298
    %v444 = vunpack.c.l.b16 %v299
    %v445 = vunpack.c.h.b16 %v299
    %v446 = vunpack.c.l.b16 %v300
    %v447 = vunpack.c.h.b16 %v300
    %v448 = vunpack.c.l.b16 %v301
    %v449 = vunpack.c.h.b16 %v301
    %v450 = vunpack.c.l.b16 %v302
    %v451 = vunpack.c.h.b16 %v302
    %v452 = vunpack.c.l.b16 %v303
    %v453 = vunpack.c.h.b16 %v303
    %v454 = vunpack.c.l.b16 %v304
    %v455 = vunpack.c.h.b16 %v304
    %v456 = vunpack.c.l.b16 %v305
    %v457 = vunpack.c.h.b16 %v305
    %v458 = vunpack.c.l.b16 %v306
    %v459 = vunpack.c.h.b16 %v306
    %v460 = vunpack.c.l.b16 %v307
    %v461 = vunpack.c.h.b16 %v307
    %v462 = vunpack.c.l.b16 %v308
    %v463 = vunpack.c.h.b16 %v308
    %v464 = vunpack.c.l.b16 %v309
    %v465 = vunpack.c.h.b16 %v309
    %v466 = vunpack.c.l.b16 %v310
    %v467 = vunpack.c.h.b16 %v310
    %v468 = vunpack.c.l.b16 %v311
    %v469 = vunpack.c.h.b16 %v311
    %v470 = vunpack.c.l.b16 %v312
    %v471 = vunpack.c.h.b16 %v312
    %v472 = vunpack.c.l.b16 %v313
    %v473 = vunpack.c.h.b16 %v313
    %v474 = vunpack.c.l.b16 %v314
    %v475 = vunpack.c.h.b16 %v314
    %v476 = vunpack.c.l.b16 %v315
    %v477 = vunpack.c.h.b16 %v315
    %v478 = vunpack.c.l.b16 %v316
    %v479 = vunpack.c.h.b16 %v316
    %v480 = vunpack.c.l.b16 %v317
    %v481 = vunpack.c.h.b16 %v317
    %v482 = vunpack.c.l.b16 %v318
    %v483 = vunpack.c.h.b16 %v318
    %v484 = vunpack.c.l.b16 %v319
    %v485 = vunpack.c.h.b16 %v319
    %v486 = vunpack.c.l.b16 %v320
    %v487 = vunpack.c.h.b16 %v320
    %v488 = vunpack.c.l.b16 %v321
    %v489 = vunpack.c.h.b16 %v321
    %v490 = vunpack.c.l.b16 %v322
    %v491 = vunpack.c.h.b16 %v322
    %v492 = vunpack.c.l.b16 %v323
    %v493 = vunpack.c.h.b16 %v323
    %v494 = vunpack.c.l.b16 %v324
    %v495 = vunpack.c.h.b16 %v324
    %v496 = vunpack.c.l.b16 %v325
    %v497 = vunpack.c.h.b16 %v325
    %v498 = vunpack.c.l.b16 %v326
    %v499 = vunpack.c.h.b16 %v326
    %v500 = vunpack.c.l.b16 %v327
    %v501 = vunpack.c.h.b16 %v327
    %v502 = vunpack.c.l.b16 %v328
    %v503 = vunpack.c.h.b16 %v328
    %v504 = vunpack.c.l.b16 %v329
    %v505 = vunpack.c.h.b16 %v329
    %v506 = vunpack.c.l.b16 %v330
    %v507 = vunpack.c.h.b16 %v330
    %v508 = vunpack.c.l.b16 %v331
    %v509 = vunpack.c.h.b16 %v331
    %v510 = vunpack.c.l.b16 %v332
    %v511 = vunpack.c.h.b16 %v332
    %v512 = vunpack.c.l.b16 %v333
    %v513 = vunpack.c.h.b16 %v333
    %v514 = vunpack.c.l.b16 %v334
    %v515 = vunpack.c.h.b16 %v334
    %v516 = vunpack.c.l.b16 %v335
    %v517 = vunpack.c.h.b16 %v335
    %v518 = vunpack.c.l.b16 %v336
    %v519 = vunpack.c.h.b16 %v336
    %v520 = vunpack.c.l.b16 %v337
    %v521 = vunpack.c.h.b16 %v337
    %v522 = vunpack.c.l.b16 %v338
    %v523 = vunpack.c.h.b16 %v338
    %v524 = vunpack.c.l.b16 %v339
    %v525 = vunpack.c.h.b16 %v339
    %v526 = vunpack.c.l.b16 %v340
    %v527 = vunpack.c.h.b16 %v340
    %v528 = vunpack.c.l.b16 %v341
    %v529 = vunpack.c.h.b16 %v341
    %v530 = vunpack.c.l.b16 %v342
    %v531 = vunpack.c.h.b16 %v342
    %v532 = vunpack.c.l.b16 %v343
    %v533 = vunpack.c.h.b16 %v343
    %v534 = vunpack.c.l.b16 %v344
    %v535 = vunpack.c.h.b16 %v344
    %v536 = vunpack.c.l.b16 %v345
    %v537 = vunpack.c.h.b16 %v345
    %v538 = vpack.c.b16 %v414, %v410
    %v539 = vpack.c.b16 %v415, %v411
    %v540 = vpack.c.b16 %v416, %v412
    %v541 = vpack.c.b16 %v417, %v413
    %v542 = vpack.c.b16 %v422, %v418
    %v543 = vpack.c.b16 %v423, %v419
    %v544 = vpack.c.b16 %v424, %v420
    %v545 = vpack.c.b16 %v425, %v421
    %v546 = vpack.c.b16 %v430, %v426
    %v547 = vpack.c.b16 %v431, %v427
    %v548 = vpack.c.b16 %v432, %v428
    %v549 = vpack.c.b16 %v433, %v429
    %v550 = vpack.c.b16 %v438, %v434
    %v551 = vpack.c.b16 %v439, %v435
    %v552 = vpack.c.b16 %v440, %v436
    %v553 = vpack.c.b16 %v441, %v437
    %v554 = vpack.c.b16 %v446, %v442
    %v555 = vpack.c.b16 %v447, %v443
    %v556 = vpack.c.b16 %v448, %v444
    %v557 = vpack.c.b16 %v449, %v445
    %v558 = vpack.c.b16 %v454, %v450
    %v559 = vpack.c.b16 %v455, %v451
    %v560 = vpack.c.b16 %v456, %v452
    %v561 = vpack.c.b16 %v457, %v453
    %v562 = vpack.c.b16 %v462, %v458
    %v563 = vpack.c.b16 %v463, %v459
    %v564 = vpack.c.b16 %v464, %v460
    %v565 = vpack.c.b16 %v465, %v461
    %v566 = vpack.c.b16 %v470, %v466
    %v567 = vpack.c.b16 %v471, %v467
    %v568 = vpack.c.b16 %v472, %v468
    %v569 = vpack.c.b16 %v473, %v469
    %v570 = vpack.c.b16 %v478, %v474
    %v571 = vpack.c.b16 %v479, %v475
    %v572 = vpack.c.b16 %v480, %v476
    %v573 = vpack.c.b16 %v481, %v477
    %v574 = vpack.c.b16 %v486, %v482
    %v575 = vpack.c.b16 %v487, %v483
    %v576 = vpack.c.b16 %v488, %v484
    %v577 = vpack.c.b16 %v489, %v485
    %v578 = vpack.c.b16 %v494, %v490
    %v579 = vpack.c.b16 %v495, %v491
    %v580 = vpack.c.b16 %v496, %v492
    %v581 = vpack.c.b16 %v497, %v493
    %v582 = vpack.c.b16 %v502, %v498
    %v583 = vpack.c.b16 %v503, %v499
    %v584 = vpack.c.b16 %v504, %v500
    %v585 = vpack.c.b16 %v505, %v501
    %v586 = vpack.c.b16 %v510, %v506
    %v587 = vpack.c.b16 %v511, %v507
    %v588 = vpack.c.b16 %v512, %v508
    %v589 = vpack.c.b16 %v513, %v509
    %v590 = vpack.c.b16 %v518, %v514
    %v591 = vpack.c.b16 %v519, %v515
    %v592 = vpack.c.b16 %v520, %v516
    %v593 = vpack.c.b16 %v521, %v517
    %v594 = vpack.c.b16 %v526, %v522
    %v595 = vpack.c.b16 %v527, %v523
    %v596 = vpack.c.b16 %v528, %v524
    %v597 = vpack.c.b16 %v529, %v525
    %v598 = vpack.c.b16 %v534, %v530
    %v599 = vpack.c.b16 %v535, %v531
    %v600 = vpack.c.b16 %v536, %v532
    %v601 = vpack.c.b16 %v537, %v533
    %666 = vmatprep.subr.bf16.mxu0 %v539
    %667 = vmatpush1.bf16.msra.mxu0 %v538
    %668 = vmatprep.subr.bf16.mxu0 %v543
    %669 = vmatpush1.bf16.msra.mxu0 %v542
    %670 = vmatprep.subr.bf16.mxu0 %v547
    %671 = vmatpush1.bf16.msra.mxu0 %v546
    %672 = vmatprep.subr.bf16.mxu0 %v551
    %673 = vmatpush1.bf16.msra.mxu0 %v550
    %674 = vmatprep.subr.bf16.mxu0 %v555
    %675 = vmatpush1.bf16.msra.mxu0 %v554
    %676 = vmatprep.subr.bf16.mxu0 %v559
    %677 = vmatpush1.bf16.msra.mxu0 %v558
    %678 = vmatprep.subr.bf16.mxu0 %v563
    %679 = vmatpush1.bf16.msra.mxu0 %v562
    %680 = vmatprep.subr.bf16.mxu0 %v567
    %681 = vmatpush1.bf16.msra.mxu0 %v566
    %682 = vmatprep.subr.bf16.mxu0 %v571
    %683 = vmatpush1.bf16.msra.mxu0 %v570
    %684 = vmatprep.subr.bf16.mxu0 %v575
    %685 = vmatpush1.bf16.msra.mxu0 %v574
    %686 = vmatprep.subr.bf16.mxu0 %v579
    %687 = vmatpush1.bf16.msra.mxu0 %v578
    %688 = vmatprep.subr.bf16.mxu0 %v583
    %689 = vmatpush1.bf16.msra.mxu0 %v582
    %690 = vmatprep.subr.bf16.mxu0 %v587
    %691 = vmatpush1.bf16.msra.mxu0 %v586
    %692 = vmatprep.subr.bf16.mxu0 %v591
    %693 = vmatpush1.bf16.msra.mxu0 %v590
    %694 = vmatprep.subr.bf16.mxu0 %v595
    %695 = vmatpush1.bf16.msra.mxu0 %v594
    %696 = vmatprep.subr.bf16.mxu0 %v599
    %697 = vmatpush1.bf16.msra.mxu0 %v598
    %698 = vmatprep.mubr.bf16.mxu0 %v281
    %699 = vmatmul.mubr.bf16.gmra.mrb[0].mxu0 %v280
    %v700 = vpop.f32.mrb[0].mxu0
    %v701 = vadd.f32 0.0, %v700
    %v702 = vpop.f32.mrb[0].mxu0
    %v703 = vadd.f32 0.0, %v702
    %v704 = vpop.f32.mrb[0].mxu0
    %v705 = vpop.f32.mrb[0].mxu0
    %706 = vdwg.mxu0
    %707 = vmatprep.subr.bf16.mxu0 %v541
    %708 = vmatpush1.bf16.msra.mxu0 %v540
    %709 = vmatprep.subr.bf16.mxu0 %v545
    %710 = vmatpush1.bf16.msra.mxu0 %v544
    %711 = vmatprep.subr.bf16.mxu0 %v549
    %712 = vmatpush1.bf16.msra.mxu0 %v548
    %713 = vmatprep.subr.bf16.mxu0 %v553
    %714 = vmatpush1.bf16.msra.mxu0 %v552
    %715 = vmatprep.subr.bf16.mxu0 %v557
    %716 = vmatpush1.bf16.msra.mxu0 %v556
    %717 = vmatprep.subr.bf16.mxu0 %v561
    %718 = vmatpush1.bf16.msra.mxu0 %v560
    %719 = vmatprep.subr.bf16.mxu0 %v565
    %720 = vmatpush1.bf16.msra.mxu0 %v564
    %721 = vmatprep.subr.bf16.mxu0 %v569
    %722 = vmatpush1.bf16.msra.mxu0 %v568
    %723 = vmatprep.subr.bf16.mxu0 %v573
    %724 = vmatpush1.bf16.msra.mxu0 %v572
    %725 = vmatprep.subr.bf16.mxu0 %v577
    %726 = vmatpush1.bf16.msra.mxu0 %v576
    %727 = vmatprep.subr.bf16.mxu0 %v581
    %728 = vmatpush1.bf16.msra.mxu0 %v580
    %729 = vmatprep.subr.bf16.mxu0 %v585
    %730 = vmatpush1.bf16.msra.mxu0 %v584
    %731 = vmatprep.subr.bf16.mxu0 %v589
    %732 = vmatpush1.bf16.msra.mxu0 %v588
    %733 = vmatprep.subr.bf16.mxu0 %v593
    %734 = vmatpush1.bf16.msra.mxu0 %v592
    %735 = vmatprep.subr.bf16.mxu0 %v597
    %736 = vmatpush1.bf16.msra.mxu0 %v596
    %737 = vmatprep.subr.bf16.mxu0 %v601
    %738 = vmatpush1.bf16.msra.mxu0 %v600
    %739 = vmatprep.mubr.bf16.mxu0 %v281
    %740 = vmatmul.mubr.bf16.gmra.mrb[0].mxu0 %v280
    %v741 = vpop.f32.mrb[0].mxu0
    %v742 = vadd.f32 0.0, %v741
    %v743 = vpop.f32.mrb[0].mxu0
    %v744 = vadd.f32 0.0, %v743
    %v745 = vpop.f32.mrb[0].mxu0
    %v746 = vpop.f32.mrb[0].mxu0
    %747 = vdwg.mxu0
    %v748 = vpack.c.bf16 %v701, %v701
    %v749 = vpack.c.bf16 %v703, %v703
    %v750 = vpack.c.bf16 %v742, %v742
    %v751 = vpack.c.bf16 %v744, %v744
    %v752 = vld [vmem:[%s4] sm:$0xf]
    %v755 = vunpack.c.l.s4 1966171168
    %v756 = vunpack.c.0.s8 %v755
    %v757 = vlaneseq
    %v758 = vshrl.u32 %v757, 7
    %v759 = vsub.s32 %v756, %v758
    %v760 = vrot.slane %v752, %v759
    %v761 = vcombine.high %v760, %v760
    %v763 = vunpack.c.l.s4 1966171168
    %v764 = vunpack.c.0.s8 %v763
    %v765 = vlaneseq
    %v766 = vshrl.u32 %v765, 7
    %v767 = vsub.s32 %v764, %v766
    %v768 = vrot.slane %v760, %v767
    %v770 = vunpack.c.l.s4 1966171168
    %v771 = vunpack.c.0.s8 %v770
    %v772 = vlaneseq
    %v773 = vshrl.u32 %v772, 7
    %v774 = vsub.s32 %v771, %v773
    %v775 = vrot.slane %v761, %v774
    %v776 = vcombine.high %v768, %v768
    %v777 = vcombine.high %v775, %v775
    %v779 = vpack.i.b16 %v768, %v768
    %v781 = vlaneseq
    %v782 = vshrl.u32 %v781, 7
    %v783 = vsub.s32 0, %v782
    %v784 = vrot.slane %v779, %v783
    %v786 = vpack.i.b16 %v775, %v775
    %v788 = vlaneseq
    %v789 = vshrl.u32 %v788, 7
    %v790 = vsub.s32 0, %v789
    %v791 = vrot.slane %v786, %v790
    %v793 = vpack.i.b16 %v776, %v776
    %v795 = vlaneseq
    %v796 = vshrl.u32 %v795, 7
    %v797 = vsub.s32 0, %v796
    %v798 = vrot.slane %v793, %v797
    %v800 = vpack.i.b16 %v777, %v777
    %v802 = vlaneseq
    %v803 = vshrl.u32 %v802, 7
    %v804 = vsub.s32 0, %v803
    %v805 = vrot.slane %v800, %v804
    %v806 = vadd.bf16 %v748, %v784
    %v807 = vadd.bf16 %v749, %v791
    %v808 = vadd.bf16 %v750, %v798
    %v809 = vadd.bf16 %v751, %v805
    %v810 = vmax.bf16 %v806, 0
    %v811 = vmax.bf16 %v807, 0
    %v812 = vmax.bf16 %v808, 0
    %v813 = vmax.bf16 %v809, 0
    %v814 = vld [vmem:[#allocation8] sm:$0xff]
    %v815 = vld [vmem:[#allocation8 + $0x8] sm:$0xff]
    %v816 = vld [vmem:[#allocation8 + $0x10] sm:$0xff]
    %v817 = vld [vmem:[#allocation8 + $0x18] sm:$0xff]
    %v818 = vld [vmem:[#allocation8 + $0x20] sm:$0xff]
    %v819 = vld [vmem:[#allocation8 + $0x28] sm:$0xff]
    %v820 = vld [vmem:[#allocation8 + $0x30] sm:$0xff]
    %v821 = vld [vmem:[#allocation8 + $0x38] sm:$0xff]
    %v822 = vld [vmem:[#allocation8 + $0x40] sm:$0xff]
    %v823 = vld [vmem:[#allocation8 + $0x48] sm:$0xff]
    %v824 = vld [vmem:[#allocation8 + $0x50] sm:$0xff]
    %v825 = vld [vmem:[#allocation8 + $0x58] sm:$0xff]
    %v826 = vld [vmem:[#allocation8 + $0x60] sm:$0xff]
    %v827 = vld [vmem:[#allocation8 + $0x68] sm:$0xff]
    %v828 = vld [vmem:[#allocation8 + $0x70] sm:$0xff]
    %v829 = vld [vmem:[#allocation8 + $0x78] sm:$0xff]
    %v830 = vld [vmem:[#allocation8 + $0x80] sm:$0xff]
    %v831 = vld [vmem:[#allocation8 + $0x88] sm:$0xff]
    %v832 = vld [vmem:[#allocation8 + $0x90] sm:$0xff]
    %v833 = vld [vmem:[#allocation8 + $0x98] sm:$0xff]
    %v834 = vld [vmem:[#allocation8 + $0xa0] sm:$0xff]
    %v835 = vld [vmem:[#allocation8 + $0xa8] sm:$0xff]
    %v836 = vld [vmem:[#allocation8 + $0xb0] sm:$0xff]
    %v837 = vld [vmem:[#allocation8 + $0xb8] sm:$0xff]
    %v838 = vld [vmem:[#allocation8 + $0xc0] sm:$0xff]
    %v839 = vld [vmem:[#allocation8 + $0xc8] sm:$0xff]
    %v840 = vld [vmem:[#allocation8 + $0xd0] sm:$0xff]
    %v841 = vld [vmem:[#allocation8 + $0xd8] sm:$0xff]
    %v842 = vld [vmem:[#allocation8 + $0xe0] sm:$0xff]
    %v843 = vld [vmem:[#allocation8 + $0xe8] sm:$0xff]
    %v844 = vld [vmem:[#allocation8 + $0xf0] sm:$0xff]
    %v845 = vld [vmem:[#allocation8 + $0xf8] sm:$0xff]
    %v846 = vld [vmem:[#allocation8 + $0x100] sm:$0xff]
    %v847 = vld [vmem:[#allocation8 + $0x108] sm:$0xff]
    %v848 = vld [vmem:[#allocation8 + $0x110] sm:$0xff]
    %v849 = vld [vmem:[#allocation8 + $0x118] sm:$0xff]
    %v850 = vld [vmem:[#allocation8 + $0x120] sm:$0xff]
    %v851 = vld [vmem:[#allocation8 + $0x128] sm:$0xff]
    %v852 = vld [vmem:[#allocation8 + $0x130] sm:$0xff]
    %v853 = vld [vmem:[#allocation8 + $0x138] sm:$0xff]
    %v854 = vld [vmem:[#allocation8 + $0x140] sm:$0xff]
    %v855 = vld [vmem:[#allocation8 + $0x148] sm:$0xff]
    %v856 = vld [vmem:[#allocation8 + $0x150] sm:$0xff]
    %v857 = vld [vmem:[#allocation8 + $0x158] sm:$0xff]
    %v858 = vld [vmem:[#allocation8 + $0x160] sm:$0xff]
    %v859 = vld [vmem:[#allocation8 + $0x168] sm:$0xff]
    %v860 = vld [vmem:[#allocation8 + $0x170] sm:$0xff]
    %v861 = vld [vmem:[#allocation8 + $0x178] sm:$0xff]
    %v862 = vld [vmem:[#allocation8 + $0x180] sm:$0xff]
    %v863 = vld [vmem:[#allocation8 + $0x188] sm:$0xff]
    %v864 = vld [vmem:[#allocation8 + $0x190] sm:$0xff]
    %v865 = vld [vmem:[#allocation8 + $0x198] sm:$0xff]
    %v866 = vld [vmem:[#allocation8 + $0x1a0] sm:$0xff]
    %v867 = vld [vmem:[#allocation8 + $0x1a8] sm:$0xff]
    %v868 = vld [vmem:[#allocation8 + $0x1b0] sm:$0xff]
    %v869 = vld [vmem:[#allocation8 + $0x1b8] sm:$0xff]
    %v870 = vld [vmem:[#allocation8 + $0x1c0] sm:$0xff]
    %v871 = vld [vmem:[#allocation8 + $0x1c8] sm:$0xff]
    %v872 = vld [vmem:[#allocation8 + $0x1d0] sm:$0xff]
    %v873 = vld [vmem:[#allocation8 + $0x1d8] sm:$0xff]
    %v874 = vld [vmem:[#allocation8 + $0x1e0] sm:$0xff]
    %v875 = vld [vmem:[#allocation8 + $0x1e8] sm:$0xff]
    %v876 = vld [vmem:[#allocation8 + $0x1f0] sm:$0xff]
    %v877 = vld [vmem:[#allocation8 + $0x1f8] sm:$0xff]
    %v942 = vunpack.c.l.b16 %v814
    %v943 = vunpack.c.h.b16 %v814
    %v944 = vunpack.c.l.b16 %v815
    %v945 = vunpack.c.h.b16 %v815
    %v946 = vunpack.c.l.b16 %v816
    %v947 = vunpack.c.h.b16 %v816
    %v948 = vunpack.c.l.b16 %v817
    %v949 = vunpack.c.h.b16 %v817
    %v950 = vunpack.c.l.b16 %v818
    %v951 = vunpack.c.h.b16 %v818
    %v952 = vunpack.c.l.b16 %v819
    %v953 = vunpack.c.h.b16 %v819
    %v954 = vunpack.c.l.b16 %v820
    %v955 = vunpack.c.h.b16 %v820
    %v956 = vunpack.c.l.b16 %v821
    %v957 = vunpack.c.h.b16 %v821
    %v958 = vunpack.c.l.b16 %v822
    %v959 = vunpack.c.h.b16 %v822
    %v960 = vunpack.c.l.b16 %v823
    %v961 = vunpack.c.h.b16 %v823
    %v962 = vunpack.c.l.b16 %v824
    %v963 = vunpack.c.h.b16 %v824
    %v964 = vunpack.c.l.b16 %v825
    %v965 = vunpack.c.h.b16 %v825
    %v966 = vunpack.c.l.b16 %v826
    %v967 = vunpack.c.h.b16 %v826
    %v968 = vunpack.c.l.b16 %v827
    %v969 = vunpack.c.h.b16 %v827
    %v970 = vunpack.c.l.b16 %v828
    %v971 = vunpack.c.h.b16 %v828
    %v972 = vunpack.c.l.b16 %v829
    %v973 = vunpack.c.h.b16 %v829
    %v974 = vunpack.c.l.b16 %v830
    %v975 = vunpack.c.h.b16 %v830
    %v976 = vunpack.c.l.b16 %v831
    %v977 = vunpack.c.h.b16 %v831
    %v978 = vunpack.c.l.b16 %v832
    %v979 = vunpack.c.h.b16 %v832
    %v980 = vunpack.c.l.b16 %v833
    %v981 = vunpack.c.h.b16 %v833
    %v982 = vunpack.c.l.b16 %v834
    %v983 = vunpack.c.h.b16 %v834
    %v984 = vunpack.c.l.b16 %v835
    %v985 = vunpack.c.h.b16 %v835
    %v986 = vunpack.c.l.b16 %v836
    %v987 = vunpack.c.h.b16 %v836
    %v988 = vunpack.c.l.b16 %v837
    %v989 = vunpack.c.h.b16 %v837
    %v990 = vunpack.c.l.b16 %v838
    %v991 = vunpack.c.h.b16 %v838
    %v992 = vunpack.c.l.b16 %v839
    %v993 = vunpack.c.h.b16 %v839
    %v994 = vunpack.c.l.b16 %v840
    %v995 = vunpack.c.h.b16 %v840
    %v996 = vunpack.c.l.b16 %v841
    %v997 = vunpack.c.h.b16 %v841
    %v998 = vunpack.c.l.b16 %v842
    %v999 = vunpack.c.h.b16 %v842
    %v1000 = vunpack.c.l.b16 %v843
    %v1001 = vunpack.c.h.b16 %v843
    %v1002 = vunpack.c.l.b16 %v844
    %v1003 = vunpack.c.h.b16 %v844
    %v1004 = vunpack.c.l.b16 %v845
    %v1005 = vunpack.c.h.b16 %v845
    %v1006 = vunpack.c.l.b16 %v846
    %v1007 = vunpack.c.h.b16 %v846
    %v1008 = vunpack.c.l.b16 %v847
    %v1009 = vunpack.c.h.b16 %v847
    %v1010 = vunpack.c.l.b16 %v848
    %v1011 = vunpack.c.h.b16 %v848
    %v1012 = vunpack.c.l.b16 %v849
    %v1013 = vunpack.c.h.b16 %v849
    %v1014 = vunpack.c.l.b16 %v850
    %v1015 = vunpack.c.h.b16 %v850
    %v1016 = vunpack.c.l.b16 %v851
    %v1017 = vunpack.c.h.b16 %v851
    %v1018 = vunpack.c.l.b16 %v852
    %v1019 = vunpack.c.h.b16 %v852
    %v1020 = vunpack.c.l.b16 %v853
    %v1021 = vunpack.c.h.b16 %v853
    %v1022 = vunpack.c.l.b16 %v854
    %v1023 = vunpack.c.h.b16 %v854
    %v1024 = vunpack.c.l.b16 %v855
    %v1025 = vunpack.c.h.b16 %v855
    %v1026 = vunpack.c.l.b16 %v856
    %v1027 = vunpack.c.h.b16 %v856
    %v1028 = vunpack.c.l.b16 %v857
    %v1029 = vunpack.c.h.b16 %v857
    %v1030 = vunpack.c.l.b16 %v858
    %v1031 = vunpack.c.h.b16 %v858
    %v1032 = vunpack.c.l.b16 %v859
    %v1033 = vunpack.c.h.b16 %v859
    %v1034 = vunpack.c.l.b16 %v860
    %v1035 = vunpack.c.h.b16 %v860
    %v1036 = vunpack.c.l.b16 %v861
    %v1037 = vunpack.c.h.b16 %v861
    %v1038 = vunpack.c.l.b16 %v862
    %v1039 = vunpack.c.h.b16 %v862
    %v1040 = vunpack.c.l.b16 %v863
    %v1041 = vunpack.c.h.b16 %v863
    %v1042 = vunpack.c.l.b16 %v864
    %v1043 = vunpack.c.h.b16 %v864
    %v1044 = vunpack.c.l.b16 %v865
    %v1045 = vunpack.c.h.b16 %v865
    %v1046 = vunpack.c.l.b16 %v866
    %v1047 = vunpack.c.h.b16 %v866
    %v1048 = vunpack.c.l.b16 %v867
    %v1049 = vunpack.c.h.b16 %v867
    %v1050 = vunpack.c.l.b16 %v868
    %v1051 = vunpack.c.h.b16 %v868
    %v1052 = vunpack.c.l.b16 %v869
    %v1053 = vunpack.c.h.b16 %v869
    %v1054 = vunpack.c.l.b16 %v870
    %v1055 = vunpack.c.h.b16 %v870
    %v1056 = vunpack.c.l.b16 %v871
    %v1057 = vunpack.c.h.b16 %v871
    %v1058 = vunpack.c.l.b16 %v872
    %v1059 = vunpack.c.h.b16 %v872
    %v1060 = vunpack.c.l.b16 %v873
    %v1061 = vunpack.c.h.b16 %v873
    %v1062 = vunpack.c.l.b16 %v874
    %v1063 = vunpack.c.h.b16 %v874
    %v1064 = vunpack.c.l.b16 %v875
    %v1065 = vunpack.c.h.b16 %v875
    %v1066 = vunpack.c.l.b16 %v876
    %v1067 = vunpack.c.h.b16 %v876
    %v1068 = vunpack.c.l.b16 %v877
    %v1069 = vunpack.c.h.b16 %v877
    %v1070 = vpack.c.b16 %v944, %v942
    %v1071 = vpack.c.b16 %v945, %v943
    %v1072 = vpack.c.b16 %v948, %v946
    %v1073 = vpack.c.b16 %v949, %v947
    %v1074 = vpack.c.b16 %v952, %v950
    %v1075 = vpack.c.b16 %v953, %v951
    %v1076 = vpack.c.b16 %v956, %v954
    %v1077 = vpack.c.b16 %v957, %v955
    %v1078 = vpack.c.b16 %v960, %v958
    %v1079 = vpack.c.b16 %v961, %v959
    %v1080 = vpack.c.b16 %v964, %v962
    %v1081 = vpack.c.b16 %v965, %v963
    %v1082 = vpack.c.b16 %v968, %v966
    %v1083 = vpack.c.b16 %v969, %v967
    %v1084 = vpack.c.b16 %v972, %v970
    %v1085 = vpack.c.b16 %v973, %v971
    %v1086 = vpack.c.b16 %v976, %v974
    %v1087 = vpack.c.b16 %v977, %v975
    %v1088 = vpack.c.b16 %v980, %v978
    %v1089 = vpack.c.b16 %v981, %v979
    %v1090 = vpack.c.b16 %v984, %v982
    %v1091 = vpack.c.b16 %v985, %v983
    %v1092 = vpack.c.b16 %v988, %v986
    %v1093 = vpack.c.b16 %v989, %v987
    %v1094 = vpack.c.b16 %v992, %v990
    %v1095 = vpack.c.b16 %v993, %v991
    %v1096 = vpack.c.b16 %v996, %v994
    %v1097 = vpack.c.b16 %v997, %v995
    %v1098 = vpack.c.b16 %v1000, %v998
    %v1099 = vpack.c.b16 %v1001, %v999
    %v1100 = vpack.c.b16 %v1004, %v1002
    %v1101 = vpack.c.b16 %v1005, %v1003
    %v1102 = vpack.c.b16 %v1008, %v1006
    %v1103 = vpack.c.b16 %v1009, %v1007
    %v1104 = vpack.c.b16 %v1012, %v1010
    %v1105 = vpack.c.b16 %v1013, %v1011
    %v1106 = vpack.c.b16 %v1016, %v1014
    %v1107 = vpack.c.b16 %v1017, %v1015
    %v1108 = vpack.c.b16 %v1020, %v1018
    %v1109 = vpack.c.b16 %v1021, %v1019
    %v1110 = vpack.c.b16 %v1024, %v1022
    %v1111 = vpack.c.b16 %v1025, %v1023
    %v1112 = vpack.c.b16 %v1028, %v1026
    %v1113 = vpack.c.b16 %v1029, %v1027
    %v1114 = vpack.c.b16 %v1032, %v1030
    %v1115 = vpack.c.b16 %v1033, %v1031
    %v1116 = vpack.c.b16 %v1036, %v1034
    %v1117 = vpack.c.b16 %v1037, %v1035
    %v1118 = vpack.c.b16 %v1040, %v1038
    %v1119 = vpack.c.b16 %v1041, %v1039
    %v1120 = vpack.c.b16 %v1044, %v1042
    %v1121 = vpack.c.b16 %v1045, %v1043
    %v1122 = vpack.c.b16 %v1048, %v1046
    %v1123 = vpack.c.b16 %v1049, %v1047
    %v1124 = vpack.c.b16 %v1052, %v1050
    %v1125 = vpack.c.b16 %v1053, %v1051
    %v1126 = vpack.c.b16 %v1056, %v1054
    %v1127 = vpack.c.b16 %v1057, %v1055
    %v1128 = vpack.c.b16 %v1060, %v1058
    %v1129 = vpack.c.b16 %v1061, %v1059
    %v1130 = vpack.c.b16 %v1064, %v1062
    %v1131 = vpack.c.b16 %v1065, %v1063
    %v1132 = vpack.c.b16 %v1068, %v1066
    %v1133 = vpack.c.b16 %v1069, %v1067
    %1198 = vmatprep.subr.bf16.mxu0 %v1071
    %1199 = vmatpush1.bf16.msra.mxu0 %v1070
    %1200 = vmatprep.subr.bf16.mxu0 %v1073
    %1201 = vmatpush1.bf16.msra.mxu0 %v1072
    %1202 = vmatprep.subr.bf16.mxu0 %v1075
    %1203 = vmatpush1.bf16.msra.mxu0 %v1074
    %1204 = vmatprep.subr.bf16.mxu0 %v1077
    %1205 = vmatpush1.bf16.msra.mxu0 %v1076
    %1206 = vmatprep.subr.bf16.mxu0 %v1079
    %1207 = vmatpush1.bf16.msra.mxu0 %v1078
    %1208 = vmatprep.subr.bf16.mxu0 %v1081
    %1209 = vmatpush1.bf16.msra.mxu0 %v1080
    %1210 = vmatprep.subr.bf16.mxu0 %v1083
    %1211 = vmatpush1.bf16.msra.mxu0 %v1082
    %1212 = vmatprep.subr.bf16.mxu0 %v1085
    %1213 = vmatpush1.bf16.msra.mxu0 %v1084
    %1214 = vmatprep.subr.bf16.mxu0 %v1087
    %1215 = vmatpush1.bf16.msra.mxu0 %v1086
    %1216 = vmatprep.subr.bf16.mxu0 %v1089
    %1217 = vmatpush1.bf16.msra.mxu0 %v1088
    %1218 = vmatprep.subr.bf16.mxu0 %v1091
    %1219 = vmatpush1.bf16.msra.mxu0 %v1090
    %1220 = vmatprep.subr.bf16.mxu0 %v1093
    %1221 = vmatpush1.bf16.msra.mxu0 %v1092
    %1222 = vmatprep.subr.bf16.mxu0 %v1095
    %1223 = vmatpush1.bf16.msra.mxu0 %v1094
    %1224 = vmatprep.subr.bf16.mxu0 %v1097
    %1225 = vmatpush1.bf16.msra.mxu0 %v1096
    %1226 = vmatprep.subr.bf16.mxu0 %v1099
    %1227 = vmatpush1.bf16.msra.mxu0 %v1098
    %1228 = vmatprep.subr.bf16.mxu0 %v1101
    %1229 = vmatpush1.bf16.msra.mxu0 %v1100
    %1230 = vmatprep.mubr.bf16.mxu0 %v811
    %1231 = vmatmul.mubr.bf16.gmra.mrb[0].mxu0 %v810
    %v1232 = vpop.f32.mrb[0].mxu0
    %v1233 = vadd.f32 0.0, %v1232
    %v1234 = vpop.f32.mrb[0].mxu0
    %v1235 = vadd.f32 0.0, %v1234
    %v1236 = vpop.f32.mrb[0].mxu0
    %v1237 = vpop.f32.mrb[0].mxu0
    %1238 = vdwg.mxu0
    %1239 = vmatprep.subr.bf16.mxu0 %v1103
    %1240 = vmatpush1.bf16.msra.mxu0 %v1102
    %1241 = vmatprep.subr.bf16.mxu0 %v1105
    %1242 = vmatpush1.bf16.msra.mxu0 %v1104
    %1243 = vmatprep.subr.bf16.mxu0 %v1107
    %1244 = vmatpush1.bf16.msra.mxu0 %v1106
    %1245 = vmatprep.subr.bf16.mxu0 %v1109
    %1246 = vmatpush1.bf16.msra.mxu0 %v1108
    %1247 = vmatprep.subr.bf16.mxu0 %v1111
    %1248 = vmatpush1.bf16.msra.mxu0 %v1110
    %1249 = vmatprep.subr.bf16.mxu0 %v1113
    %1250 = vmatpush1.bf16.msra.mxu0 %v1112
    %1251 = vmatprep.subr.bf16.mxu0 %v1115
    %1252 = vmatpush1.bf16.msra.mxu0 %v1114
    %1253 = vmatprep.subr.bf16.mxu0 %v1117
    %1254 = vmatpush1.bf16.msra.mxu0 %v1116
    %1255 = vmatprep.subr.bf16.mxu0 %v1119
    %1256 = vmatpush1.bf16.msra.mxu0 %v1118
    %1257 = vmatprep.subr.bf16.mxu0 %v1121
    %1258 = vmatpush1.bf16.msra.mxu0 %v1120
    %1259 = vmatprep.subr.bf16.mxu0 %v1123
    %1260 = vmatpush1.bf16.msra.mxu0 %v1122
    %1261 = vmatprep.subr.bf16.mxu0 %v1125
    %1262 = vmatpush1.bf16.msra.mxu0 %v1124
    %1263 = vmatprep.subr.bf16.mxu0 %v1127
    %1264 = vmatpush1.bf16.msra.mxu0 %v1126
    %1265 = vmatprep.subr.bf16.mxu0 %v1129
    %1266 = vmatpush1.bf16.msra.mxu0 %v1128
    %1267 = vmatprep.subr.bf16.mxu0 %v1131
    %1268 = vmatpush1.bf16.msra.mxu0 %v1130
    %1269 = vmatprep.subr.bf16.mxu0 %v1133
    %1270 = vmatpush1.bf16.msra.mxu0 %v1132
    %1271 = vmatprep.mubr.bf16.mxu0 %v813
    %1272 = vmatmul.mubr.bf16.gmra.mrb[0].mxu0 %v812
    %v1273 = vpop.f32.mrb[0].mxu0
    %v1274 = vadd.f32 %v1233, %v1273
    %v1275 = vpop.f32.mrb[0].mxu0
    %v1276 = vadd.f32 %v1235, %v1275
    %v1277 = vpop.f32.mrb[0].mxu0
    %v1278 = vpop.f32.mrb[0].mxu0
    %1279 = vdwg.mxu0
    %v1280 = vpack.c.bf16 %v1274, %v1274
    %v1281 = vpack.c.bf16 %v1276, %v1276
    %v1282 = vld [vmem:[%s6] sm:$0x3]
    %v1285 = vunpack.c.l.s4 1966171168
    %v1286 = vunpack.c.0.s8 %v1285
    %v1287 = vlaneseq
    %v1288 = vshrl.u32 %v1287, 7
    %v1289 = vsub.s32 %v1286, %v1288
    %v1290 = vrot.slane %v1282, %v1289
    %v1291 = vcombine.high %v1290, %v1290
    %v1293 = vunpack.c.l.s4 1966171168
    %v1294 = vunpack.c.0.s8 %v1293
    %v1295 = vlaneseq
    %v1296 = vshrl.u32 %v1295, 7
    %v1297 = vsub.s32 %v1294, %v1296
    %v1298 = vrot.slane %v1290, %v1297
    %v1300 = vunpack.c.l.s4 1966171168
    %v1301 = vunpack.c.0.s8 %v1300
    %v1302 = vlaneseq
    %v1303 = vshrl.u32 %v1302, 7
    %v1304 = vsub.s32 %v1301, %v1303
    %v1305 = vrot.slane %v1291, %v1304
    %v1307 = vpack.i.b16 %v1298, %v1298
    %v1309 = vlaneseq
    %v1310 = vshrl.u32 %v1309, 7
    %v1311 = vsub.s32 0, %v1310
    %v1312 = vrot.slane %v1307, %v1311
    %v1314 = vpack.i.b16 %v1305, %v1305
    %v1316 = vlaneseq
    %v1317 = vshrl.u32 %v1316, 7
    %v1318 = vsub.s32 0, %v1317
    %v1319 = vrot.slane %v1314, %v1318
    %v1320 = vadd.bf16 %v1280, %v1312
    %v1321 = vadd.bf16 %v1281, %v1319
    %v1322 = vmax.bf16 %v1320, 0
    %v1323 = vmax.bf16 %v1321, 0
    %v1324 = vld [vmem:[#allocation10] sm:$0xf]
    %v1325 = vld [vmem:[#allocation10 + $0x4] sm:$0xf]
    %v1326 = vld [vmem:[#allocation10 + $0x8] sm:$0xf]
    %v1327 = vld [vmem:[#allocation10 + $0xc] sm:$0xf]
    %v1328 = vld [vmem:[#allocation10 + $0x10] sm:$0xf]
    %v1329 = vld [vmem:[#allocation10 + $0x14] sm:$0xf]
    %v1330 = vld [vmem:[#allocation10 + $0x18] sm:$0xf]
    %v1331 = vld [vmem:[#allocation10 + $0x1c] sm:$0xf]
    %v1332 = vld [vmem:[#allocation10 + $0x20] sm:$0xf]
    %v1333 = vld [vmem:[#allocation10 + $0x24] sm:$0xf]
    %v1334 = vld [vmem:[#allocation10 + $0x28] sm:$0xf]
    %v1335 = vld [vmem:[#allocation10 + $0x2c] sm:$0xf]
    %v1336 = vld [vmem:[#allocation10 + $0x30] sm:$0xf]
    %v1337 = vld [vmem:[#allocation10 + $0x34] sm:$0xf]
    %v1338 = vld [vmem:[#allocation10 + $0x38] sm:$0xf]
    %v1339 = vld [vmem:[#allocation10 + $0x3c] sm:$0xf]
    %v1340 = vld [vmem:[#allocation10 + $0x40] sm:$0xf]
    %v1341 = vld [vmem:[#allocation10 + $0x44] sm:$0xf]
    %v1342 = vld [vmem:[#allocation10 + $0x48] sm:$0xf]
    %v1343 = vld [vmem:[#allocation10 + $0x4c] sm:$0xf]
    %v1344 = vld [vmem:[#allocation10 + $0x50] sm:$0xf]
    %v1345 = vld [vmem:[#allocation10 + $0x54] sm:$0xf]
    %v1346 = vld [vmem:[#allocation10 + $0x58] sm:$0xf]
    %v1347 = vld [vmem:[#allocation10 + $0x5c] sm:$0xf]
    %v1348 = vld [vmem:[#allocation10 + $0x60] sm:$0xf]
    %v1349 = vld [vmem:[#allocation10 + $0x64] sm:$0xf]
    %v1350 = vld [vmem:[#allocation10 + $0x68] sm:$0xf]
    %v1351 = vld [vmem:[#allocation10 + $0x6c] sm:$0xf]
    %v1352 = vld [vmem:[#allocation10 + $0x70] sm:$0xf]
    %v1353 = vld [vmem:[#allocation10 + $0x74] sm:$0xf]
    %v1354 = vld [vmem:[#allocation10 + $0x78] sm:$0xf]
    %v1355 = vld [vmem:[#allocation10 + $0x7c] sm:$0xf]
    %v1388 = vunpack.c.l.b16 %v1324
    %v1389 = vunpack.c.l.b16 %v1325
    %v1390 = vunpack.c.l.b16 %v1326
    %v1391 = vunpack.c.l.b16 %v1327
    %v1392 = vunpack.c.l.b16 %v1328
    %v1393 = vunpack.c.l.b16 %v1329
    %v1394 = vunpack.c.l.b16 %v1330
    %v1395 = vunpack.c.l.b16 %v1331
    %v1396 = vunpack.c.l.b16 %v1332
    %v1397 = vunpack.c.l.b16 %v1333
    %v1398 = vunpack.c.l.b16 %v1334
    %v1399 = vunpack.c.l.b16 %v1335
    %v1400 = vunpack.c.l.b16 %v1336
    %v1401 = vunpack.c.l.b16 %v1337
    %v1402 = vunpack.c.l.b16 %v1338
    %v1403 = vunpack.c.l.b16 %v1339
    %v1404 = vunpack.c.l.b16 %v1340
    %v1405 = vunpack.c.l.b16 %v1341
    %v1406 = vunpack.c.l.b16 %v1342
    %v1407 = vunpack.c.l.b16 %v1343
    %v1408 = vunpack.c.l.b16 %v1344
    %v1409 = vunpack.c.l.b16 %v1345
    %v1410 = vunpack.c.l.b16 %v1346
    %v1411 = vunpack.c.l.b16 %v1347
    %v1412 = vunpack.c.l.b16 %v1348
    %v1413 = vunpack.c.l.b16 %v1349
    %v1414 = vunpack.c.l.b16 %v1350
    %v1415 = vunpack.c.l.b16 %v1351
    %v1416 = vunpack.c.l.b16 %v1352
    %v1417 = vunpack.c.l.b16 %v1353
    %v1418 = vunpack.c.l.b16 %v1354
    %v1419 = vunpack.c.l.b16 %v1355
    %v1420 = vpack.c.b16 %v1389, %v1388
    %v1421 = vpack.c.b16 %v1391, %v1390
    %v1422 = vpack.c.b16 %v1393, %v1392
    %v1423 = vpack.c.b16 %v1395, %v1394
    %v1424 = vpack.c.b16 %v1397, %v1396
    %v1425 = vpack.c.b16 %v1399, %v1398
    %v1426 = vpack.c.b16 %v1401, %v1400
    %v1427 = vpack.c.b16 %v1403, %v1402
    %v1428 = vpack.c.b16 %v1405, %v1404
    %v1429 = vpack.c.b16 %v1407, %v1406
    %v1430 = vpack.c.b16 %v1409, %v1408
    %v1431 = vpack.c.b16 %v1411, %v1410
    %v1432 = vpack.c.b16 %v1413, %v1412
    %v1433 = vpack.c.b16 %v1415, %v1414
    %v1434 = vpack.c.b16 %v1417, %v1416
    %v1435 = vpack.c.b16 %v1419, %v1418
    %1452 = vmatprep.subr.bf16.mxu0 0
    %1453 = vmatpush1.bf16.msra.mxu0 %v1420
    %1454 = vmatprep.subr.bf16.mxu0 0
    %1455 = vmatpush1.bf16.msra.mxu0 %v1421
    %1456 = vmatprep.subr.bf16.mxu0 0
    %1457 = vmatpush1.bf16.msra.mxu0 %v1422
    %1458 = vmatprep.subr.bf16.mxu0 0
    %1459 = vmatpush1.bf16.msra.mxu0 %v1423
    %1460 = vmatprep.subr.bf16.mxu0 0
    %1461 = vmatpush1.bf16.msra.mxu0 %v1424
    %1462 = vmatprep.subr.bf16.mxu0 0
    %1463 = vmatpush1.bf16.msra.mxu0 %v1425
    %1464 = vmatprep.subr.bf16.mxu0 0
    %1465 = vmatpush1.bf16.msra.mxu0 %v1426
    %1466 = vmatprep.subr.bf16.mxu0 0
    %1467 = vmatpush1.bf16.msra.mxu0 %v1427
    %1468 = vmatprep.subr.bf16.mxu0 0
    %1469 = vmatpush1.bf16.msra.mxu0 %v1428
    %1470 = vmatprep.subr.bf16.mxu0 0
    %1471 = vmatpush1.bf16.msra.mxu0 %v1429
    %1472 = vmatprep.subr.bf16.mxu0 0
    %1473 = vmatpush1.bf16.msra.mxu0 %v1430
    %1474 = vmatprep.subr.bf16.mxu0 0
    %1475 = vmatpush1.bf16.msra.mxu0 %v1431
    %1476 = vmatprep.subr.bf16.mxu0 0
    %1477 = vmatpush1.bf16.msra.mxu0 %v1432
    %1478 = vmatprep.subr.bf16.mxu0 0
    %1479 = vmatpush1.bf16.msra.mxu0 %v1433
    %1480 = vmatprep.subr.bf16.mxu0 0
    %1481 = vmatpush1.bf16.msra.mxu0 %v1434
    %1482 = vmatprep.subr.bf16.mxu0 0
    %1483 = vmatpush1.bf16.msra.mxu0 %v1435
    %1484 = vmatprep.mubr.bf16.mxu0 %v1323
    %1485 = vmatmul.mubr.bf16.gmra.mrb[0].mxu0 %v1322
    %v1486 = vpop.f32.mrb[0].mxu0
    %v1487 = vadd.f32 0.0, %v1486
    %v1488 = vpop.f32.mrb[0].mxu0
    %v1489 = vpop.f32.mrb[0].mxu0
    %v1490 = vpop.f32.mrb[0].mxu0
    %1491 = vdwg.mxu0
    %v1492 = vpack.c.bf16 %v1487, %v1487
    %v1493 = vld [vmem:[%s8] sm:$0x1]
    %v1495 = vpack.i.b16 %v1493, %v1493
    %v1497 = vlaneseq
    %v1498 = vshrl.u32 %v1497, 7
    %v1499 = vsub.s32 0, %v1498
    %v1500 = vrot.slane %v1495, %v1499
    %v1501 = vadd.bf16 %v1492, %v1500
    %v1502 = vtanh.bf16.pop %v1501
    %1503 = vst [vmem:[#allocation11] sm:$0xf] %v1502
    // Predicated region
    $region58: #{tpu_custom_call.1} parent=1 // pred_check
      _
    $region59: #{tpu_custom_call.1} parent=1 // pred_check_branch
      %1505 = sbr.rel (0) target = $region61
    $region60: #{tpu_custom_call.1} parent=1 // pred_region
      %s1507 = ssub.s32 64, 64
      %1508 = vsyncadd [#allocation4], %s1507
      %s1510 = sshll.u32 [#allocation11], 4
      %s1511 = int_to_ptr.vmem [resolvable:$true] %s1510
      %1513 = dma.vmem_to_hbm [thread:$0]  %s1511, 64, %s9, [#allocation4]
    $region61: #{tpu_custom_call.1} parent=1 // pred_fallthru
      _
    // Predicated region
    $region62: #{tpu_custom_call.1} parent=1 // pred_check
      _
    $region63: #{tpu_custom_call.1} parent=1 // pred_check_branch
      %1515 = sbr.rel (0) target = $region65
    $region64: #{tpu_custom_call.1} parent=1 // pred_region
      %1516 = dma.done [#allocation4], 64
    $region65: #{tpu_custom_call.1} parent=1 // pred_fallthru
      _
    %1517 = vsyncpa [#allocation3], 1
    %1518 = vsyncpa [#allocation6], 1
    %1519 = vsyncpa [#allocation9], 1
    %1520 = vsyncpa [#allocation4], 1

</llo_original>
